<compile_context>
chip_gen: v7x
topology: tpu7x:2x2x1
jax: 0.10.0
libtpu: 0.0.40
codegen_flags: <defaults>
</compile_context>

<pallas_src>
import jax
import jax.numpy as jnp
from jax import lax
from jax.experimental import pallas as pl
from jax.experimental.pallas import tpu as pltpu


def _round_up(v, m):
    return (v + m - 1) // m * m


# --------------------------------------------------------------------------- #
# Fused single-pass kernel: one grid step per batch element.
# --------------------------------------------------------------------------- #
def _fused_kernel(gamma_ref, x_ref, m_ref, o_ref):
    x = x_ref[0]                                            # (C, Np)
    q = (x * m_ref[0]).astype(x.dtype)                      # masked copy (q == k)

    # NT contraction (contract last dims) -> q @ q^T on the MXU, no transpose.
    energy = lax.dot_general(
        q, q,
        dimension_numbers=(((1,), (1,)), ((), ())),
        preferred_element_type=jnp.float32)                 # (C, C) f32

    e = energy - jnp.max(energy, axis=-1, keepdims=True)
    p = jnp.exp(e)
    inv = pl.reciprocal(jnp.sum(p, axis=-1, keepdims=True), approx=True)
    attn = (p * inv).astype(x.dtype)                        # (C, C)

    out = jnp.dot(attn, x, preferred_element_type=jnp.float32)   # (C, Np) f32
    gamma = gamma_ref[0]
    o_ref[0] = (gamma * out + x.astype(jnp.float32)).astype(o_ref.dtype)


# --------------------------------------------------------------------------- #
# Two-phase tiled fallback (large N).
# --------------------------------------------------------------------------- #
def _energy_softmax_kernel(x_ref, m_ref, attn_ref, acc_ref):
    """Phase 1: accumulate energy = (x*m) @ (x*m)^T over N tiles, then softmax."""
    j = pl.program_id(1)

    @pl.when(j == 0)
    def _():
        acc_ref[...] = jnp.zeros_like(acc_ref)

    q = (x_ref[0] * m_ref[0]).astype(x_ref.dtype)           # (C, tn)
    acc_ref[...] += lax.dot_general(
        q, q,
        dimension_numbers=(((1,), (1,)), ((), ())),
        preferred_element_type=jnp.float32)

    @pl.when(j == pl.num_programs(1) - 1)
    def _():
        e = acc_ref[...]                                    # (C, C) f32
        e = e - jnp.max(e, axis=-1, keepdims=True)
        p = jnp.exp(e)
        inv = pl.reciprocal(jnp.sum(p, axis=-1, keepdims=True), approx=True)
        attn_ref[0] = p * inv                               # keep f32 (tiny C x C)


def _project_residual_kernel(gamma_ref, attn_ref, x_ref, o_ref):
    """Phase 2: out_tile = gamma * (attn @ x_tile) + x_tile."""
    x = x_ref[0]                                            # (C, tn)
    attn = attn_ref[0].astype(x.dtype)                      # (C, C)
    out = jnp.dot(attn, x, preferred_element_type=jnp.float32)
    gamma = gamma_ref[0]                                    # scalar from SMEM
    o_ref[0] = (gamma * out + x.astype(jnp.float32)).astype(o_ref.dtype)


# --------------------------------------------------------------------------- #
# Wrapper
# --------------------------------------------------------------------------- #
def ca_block(x, mask, gamma, *, tn_target=2048, max_fused_vmem_bytes=24 * (1 << 20)):
    """x: (B, C, H, W); mask: (B, 1, H, W); gamma: array of shape (1,)."""
    B, C, H, W = x.shape
    N = H * W
    dtype = x.dtype
    itemsize = jnp.dtype(dtype).itemsize

    n128 = _round_up(N, 128)

    # Conservative VMEM estimate for the fused path: double-buffered x/mask/out
    # slabs plus f32 in-kernel temporaries.  Stay well below the scoped default
    # (32 MiB) so it is safe on v5e/v6e/v7x without raising vmem_limit_bytes.
    fused_bytes = 2 * itemsize * (2 * C + 1) * n128 + 4 * 3 * C * n128
    use_fused = fused_bytes <= max_fused_vmem_bytes

    if use_fused:
        n_pad = n128
        nt = 1
        tn = n_pad
    else:
        tn = _round_up(min(tn_target, n128), 128)
        n_pad = _round_up(N, tn)
        nt = n_pad // tn

    x3 = x.reshape(B, C, N)
    m3 = mask.reshape(B, 1, N).astype(dtype)
    if n_pad != N:
        pad = n_pad - N
        # Pad columns carry mask == 0 and x == 0, so they contribute nothing to
        # the energy and are sliced off after projection.
        x3 = jnp.pad(x3, ((0, 0), (0, 0), (0, pad)))
        m3 = jnp.pad(m3, ((0, 0), (0, 0), (0, pad)))

    gamma1 = jnp.asarray(gamma, dtype=jnp.float32).reshape(1)

    if use_fused:
        out = pl.pallas_call(
            _fused_kernel,
            out_shape=jax.ShapeDtypeStruct((B, C, n_pad), dtype),
            grid_spec=pltpu.PrefetchScalarGridSpec(
                num_scalar_prefetch=0,
                grid=(B,),
                in_specs=[
                    pl.BlockSpec(memory_space=pltpu.MemorySpace.SMEM),   # gamma
                    pl.BlockSpec((1, C, n_pad), lambda b: (b, 0, 0)),    # x slab
                    pl.BlockSpec((1, 1, n_pad), lambda b: (b, 0, 0)),    # mask slab
                ],
                out_specs=pl.BlockSpec((1, C, n_pad), lambda b: (b, 0, 0)),
            ),
            compiler_params=pltpu.CompilerParams(
                dimension_semantics=("parallel",)),
        )(gamma1, x3, m3)
    else:
        # ---- Phase 1: per-batch (C, C) attention matrix (f32) ----------------
        attn = pl.pallas_call(
            _energy_softmax_kernel,
            out_shape=jax.ShapeDtypeStruct((B, C, C), jnp.float32),
            grid_spec=pltpu.PrefetchScalarGridSpec(
                num_scalar_prefetch=0,
                grid=(B, nt),
                in_specs=[
                    pl.BlockSpec((1, C, tn), lambda b, j: (b, 0, j)),   # x tile
                    pl.BlockSpec((1, 1, tn), lambda b, j: (b, 0, j)),   # mask tile
                ],
                out_specs=pl.BlockSpec((1, C, C), lambda b, j: (b, 0, 0)),
                scratch_shapes=[pltpu.VMEM((C, C), jnp.float32)],
            ),
            compiler_params=pltpu.CompilerParams(
                dimension_semantics=("parallel", "arbitrary")),
        )(x3, m3)

        # ---- Phase 2: out = gamma * (attn @ x) + x, lane-dense slabs ---------
        out = pl.pallas_call(
            _project_residual_kernel,
            out_shape=jax.ShapeDtypeStruct((B, C, n_pad), dtype),
            grid_spec=pltpu.PrefetchScalarGridSpec(
                num_scalar_prefetch=0,
                grid=(B, nt),
                in_specs=[
                    pl.BlockSpec(memory_space=pltpu.MemorySpace.SMEM),   # gamma
                    pl.BlockSpec((1, C, C), lambda b, j: (b, 0, 0)),     # attention
                    pl.BlockSpec((1, C, tn), lambda b, j: (b, 0, j)),    # x tile
                ],
                out_specs=pl.BlockSpec((1, C, tn), lambda b, j: (b, 0, j)),
            ),
            compiler_params=pltpu.CompilerParams(
                dimension_semantics=("parallel", "parallel")),
        )(gamma1, attn, x3)

    if n_pad != N:
        out = out[:, :, :N]
    return out.reshape(B, C, H, W)


def ca_block_reference(x, mask, gamma):
    """Pure-JAX reference mirroring the PyTorch forward."""
    B, C, H, W = x.shape
    q = x.reshape(B, C, -1)
    k = x.reshape(B, C, -1)
    m = mask.reshape(B, 1, -1)
    q = q * m
    k = k * m
    energy = jnp.einsum("bcn,bdn->bcd", q, k)
    attn = jax.nn.softmax(energy, axis=-1)
    v = x.reshape(B, C, -1)
    out = jnp.einsum("bcd,bdn->bcn", attn, v).reshape(B, C, H, W)
    return gamma.reshape(()) * out + x


def _check(out, ref, tol=2e-3):
    err = float(jnp.max(jnp.abs(out - ref)))
    scale = max(1.0, float(jnp.max(jnp.abs(ref))))
    assert err < tol * scale, (err, scale)


if __name__ == "__main__":
    key = jax.random.PRNGKey(0)
    kx, km = jax.random.split(key)

    # Parameter from __init__: gamma = torch.ones(1)
    gamma = jnp.ones((1,), dtype=jnp.float32)

    # Case 1: fused path, N = H*W already a multiple of 128.
    B, C, H, W = 2, 4, 16, 16
    x = jax.random.normal(kx, (B, C, H, W), dtype=jnp.float32)
    mask = (jax.random.uniform(km, (B, 1, H, W)) > 0.5).astype(jnp.float32)
    out = jax.block_until_ready(ca_block(x, mask, gamma))
    assert out.shape == (B, C, H, W)
    _check(out, ca_block_reference(x, mask, gamma))

    # Case 2: fused path with N-padding (H*W = 100, not a multiple of 128).
    kx2, km2 = jax.random.split(jax.random.PRNGKey(1))
    B2, C2, H2, W2 = 2, 4, 10, 10
    x2 = jax.random.normal(kx2, (B2, C2, H2, W2), dtype=jnp.float32)
    mask2 = (jax.random.uniform(km2, (B2, 1, H2, W2)) > 0.5).astype(jnp.float32)
    out2 = jax.block_until_ready(ca_block(x2, mask2, gamma))
    assert out2.shape == (B2, C2, H2, W2)
    _check(out2, ca_block_reference(x2, mask2, gamma))

    # Case 3: force the two-phase tiled fallback (exercised via a zero VMEM
    # budget) with multiple N tiles and a bf16 input.
    kx3, km3 = jax.random.split(jax.random.PRNGKey(2))
    B3, C3, H3, W3 = 2, 8, 32, 32
    x3 = jax.random.normal(kx3, (B3, C3, H3, W3), dtype=jnp.float32)
    mask3 = (jax.random.uniform(km3, (B3, 1, H3, W3)) > 0.5).astype(jnp.float32)
    out3 = jax.block_until_ready(
        ca_block(x3, mask3, gamma, tn_target=256, max_fused_vmem_bytes=0))
    assert out3.shape == (B3, C3, H3, W3)
    _check(out3, ca_block_reference(x3, mask3, gamma))

    print("KERNEL_OK")
</pallas_src>

<mosaic_0001>
module attributes {stable_mosaic.version = 11 : i64} {
  func.func @_fused_kernel(%arg0: i32, %arg1: memref<1xf32, #tpu.memory_space<smem>>, %arg2: memref<1x4x256xf32, #tpu.memory_space<vmem>>, %arg3: memref<1x1x256xf32, #tpu.memory_space<vmem>>, %arg4: memref<1x4x256xf32, #tpu.memory_space<vmem>>) attributes {dimension_semantics = [#tpu.dimension_semantics<parallel>], iteration_bounds = array<i64: 2>, scalar_prefetch = 0 : i64, scratch_operands = 0 : i64, tpu.core_type = #tpu.core_type<tc>, window_params = [{transform_indices = @transform_0, window_bounds = array<i64: 1>}, {transform_indices = @transform_1, window_bounds = array<i64: 1, 4, 256>}, {transform_indices = @transform_2, window_bounds = array<i64: 1, 1, 256>}, {transform_indices = @transform_3, window_bounds = array<i64: 1, 4, 256>}]} {
    %c0 = arith.constant 0 : index
    %c0_0 = arith.constant 0 : index
    %c0_1 = arith.constant 0 : index
    %0 = vector.load %arg2[%c0, %c0_0, %c0_1] : memref<1x4x256xf32, #tpu.memory_space<vmem>>, vector<1x4x256xf32>
    %1 = vector.shape_cast %0 : vector<1x4x256xf32> to vector<4x256xf32>
    %c0_2 = arith.constant 0 : index
    %c0_3 = arith.constant 0 : index
    %c0_4 = arith.constant 0 : index
    %2 = vector.load %arg3[%c0_2, %c0_3, %c0_4] : memref<1x1x256xf32, #tpu.memory_space<vmem>>, vector<1x1x256xf32>
    %3 = vector.shape_cast %2 : vector<1x1x256xf32> to vector<1x256xf32>
    %4 = vector.broadcast %3 : vector<1x256xf32> to vector<4x256xf32>
    %5 = arith.mulf %1, %4 : vector<4x256xf32>
    %cst = arith.constant dense<0.000000e+00> : vector<4x4xf32>
    %6 = tpu.matmul %5, %5, %cst {dimension_numbers = #tpu.dot_dimension_numbers<[1], [1], [0], [0], [0, 0, 1, 0], [], []>} : vector<4x256xf32>, vector<4x256xf32>, vector<4x4xf32> -> vector<4x4xf32>
    %cst_5 = arith.constant dense<0xFF800000> : vector<4xf32>
    %7 = vector.multi_reduction <maximumf>, %6, %cst_5 [1] : vector<4x4xf32> to vector<4xf32>
    %8 = vector.shape_cast %7 : vector<4xf32> to vector<4x1xf32>
    %9 = vector.broadcast %8 : vector<4x1xf32> to vector<4x4xf32>
    %10 = arith.subf %6, %9 : vector<4x4xf32>
    %11 = math.exp %10 : vector<4x4xf32>
    %cst_6 = arith.constant dense<0.000000e+00> : vector<4xf32>
    %12 = vector.multi_reduction <add>, %11, %cst_6 [1] : vector<4x4xf32> to vector<4xf32>
    %13 = vector.shape_cast %12 : vector<4xf32> to vector<4x1xf32>
    %14 = tpu.reciprocal %13 {approx = true} : vector<4x1xf32> -> vector<4x1xf32>
    %15 = vector.broadcast %14 : vector<4x1xf32> to vector<4x4xf32>
    %16 = arith.mulf %11, %15 : vector<4x4xf32>
    %cst_7 = arith.constant dense<0.000000e+00> : vector<4x256xf32>
    %17 = tpu.matmul %16, %1, %cst_7 {dimension_numbers = #tpu.dot_dimension_numbers<[1], [0], [0], [1], [0, 0, 1, 1], [], []>} : vector<4x4xf32>, vector<4x256xf32>, vector<4x256xf32> -> vector<4x256xf32>
    %c0_8 = arith.constant 0 : index
    %18 = memref.load %arg1[%c0_8] : memref<1xf32, #tpu.memory_space<smem>>
    %19 = vector.broadcast %18 : f32 to vector<4x256xf32>
    %20 = arith.mulf %19, %17 : vector<4x256xf32>
    %21 = arith.addf %20, %1 : vector<4x256xf32>
    %c0_9 = arith.constant 0 : index
    %c0_10 = arith.constant 0 : index
    %c0_11 = arith.constant 0 : index
    %22 = vector.load %arg4[%c0_9, %c0_10, %c0_11] : memref<1x4x256xf32, #tpu.memory_space<vmem>>, vector<1x4x256xf32>
    %23 = vector.shape_cast %22 : vector<1x4x256xf32> to vector<4x256xf32>
    %24 = vector.shape_cast %21 : vector<4x256xf32> to vector<1x4x256xf32>
    tpu.vector_store %arg4[%c0_9, %c0_10, %c0_11], %24 {strides = array<i32>} : memref<1x4x256xf32, #tpu.memory_space<vmem>>, vector<1x4x256xf32>,
    return
  }
  func.func @transform_0(%arg0: i32) -> i32 {
    %c0_i32 = arith.constant 0 : i32
    %c0_i32_0 = arith.constant 0 : i32
    return %c0_i32 : i32
  }
  func.func @transform_1(%arg0: i32) -> (i32, i32, i32) {
    %c0_i32 = arith.constant 0 : i32
    %c0_i32_0 = arith.constant 0 : i32
    %c0_i32_1 = arith.constant 0 : i32
    return %arg0, %c0_i32, %c0_i32_0 : i32, i32, i32
  }
  func.func @transform_2(%arg0: i32) -> (i32, i32, i32) {
    %c0_i32 = arith.constant 0 : i32
    %c0_i32_0 = arith.constant 0 : i32
    %c0_i32_1 = arith.constant 0 : i32
    return %arg0, %c0_i32, %c0_i32_0 : i32, i32, i32
  }
  func.func @transform_3(%arg0: i32) -> (i32, i32, i32) {
    %c0_i32 = arith.constant 0 : i32
    %c0_i32_0 = arith.constant 0 : i32
    %c0_i32_1 = arith.constant 0 : i32
    return %arg0, %c0_i32, %c0_i32_0 : i32, i32, i32
  }
}

</mosaic_0001>

<llo_original>
// kernel: tpu_custom_call.1
$region0: #{tpu_custom_call.1}
  #allocation0 [shape = 'u32[]', space=smem, size = 0x4, offset = 0x4, fixed_abs, tag = 'smem constant byte address 0x4 - core index']
  #allocation1 [shape = 'u32[144,128]{1,0:T(1,128)}', space=vmem, size = 0x12000, scoped, tag = 'internal scratch']
  #allocation2 [shape = 'f32[1]{0:T(128)S(6)}', space=smem, size = 0x200, scoped, tag = 'scoped memory for tpu_custom_call.1']
  %s0 = inlined_call_operand.<no memory space> [shape: f32[1], index: 0, kind: input, shape index: {}]
  %s1 = inlined_call_operand.hbm [shape: f32[2,4,256], index: 1, kind: input, shape index: {}]
  %s2 = inlined_call_operand.vmem [shape: f32[2,1,256], index: 2, kind: input, shape index: {}]
  %s3 = inlined_call_operand.hbm [shape: f32[2,4,256], index: 3, kind: output, shape index: {}]
  %s4 = sld [smem:[#allocation0]]
  $region49: #{tpu_custom_call.1} parent=0
    _
  %s6 = ssub.s32 1, %s4
  %s7 = scalar_select 0, %s6, %s4
  %8 = sst [smem:[#allocation2]] %s0
  $region1: #{tpu_custom_call.1} parent=0
    #allocation3 [shape = 'u8[8192]{0}', space=vmem, size = 0x2000, scoped, tag = 'input window, operand 1']
    #allocation4 [shape = 's32[2]{0}', space=sflag, size = 0x8, scoped, tag = 'scoped memory for tpu_custom_call.1']
    #allocation5 [shape = 's32[2]{0}', space=sflag, size = 0x8, scoped, tag = 'scoped memory for tpu_custom_call.1']
    #allocation6 [shape = 'u8[8192]{0}', space=vmem, size = 0x2000, scoped, tag = 'output window, operand 0']
    %9 = vsyncpa [#allocation4], 0
    %s10 = scalar_lea.sflag [#allocation4], 1
    %11 = vsyncpa %s10, 0
    %12 = vsyncpa [#allocation5], 0
    %s13 = scalar_lea.sflag [#allocation5], 1
    %14 = vsyncpa %s13, 0
    loop: start=0, step=1, limit=4
    $region2: #{tpu_custom_call.1} parent=1 // loop_pre_header
      _
    $region3: #{tpu_custom_call.1} parent=1 // loop_header
      %s16 = sphi 0, %s20
      %p17 = scmp.ge.s32.totalorder %s16, 4
      %s24 = sphi 0, %s24
      %s26 = sphi 0, %s24
      %s27 = sphi 0, %s26
      %s41 = sphi 0, %s27
      %s47 = sphi 0, %s49
      %s50 = sphi 0, %s47
      %s51 = sphi 0, %s50
      %s67 = sphi 0, %s51
      %s73 = sphi 0, %s75
      %s76 = sphi 0, %s73
      %s77 = sphi 0, %s76
      %s93 = sphi 0, %s77
      %s99 = sphi 0, %s101
      %s102 = sphi 0, %s99
      %s103 = sphi 0, %s102
      %s119 = sphi 0, %s103
    $region4: #{tpu_custom_call.1} parent=1 // loop_header_branch
      %19 = sbr.rel (%p17) target = $region8
    $region5: #{tpu_custom_call.1} parent=1 // loop_body
      %s21 = ssub.s32 %s16, 1
      %s22 = ssub.s32 %s16, 2
      %s23 = sadd.s32 %s16, 1
      %s25 = sadd.s32 %s24, 1
      %p28 = scmp.eq.s32.totalorder %s16, 1
      %p29 = scmp.ne.s32.totalorder %s24, %s26
      %p30 = scmp.eq.s32.totalorder %s16, 0
      %p31 = por %p29, %p30
      %p32 = scmp.ne.s32.totalorder %s24, %s26
      %p33 = scmp.eq.s32.totalorder %s21, 1
      %p34 = por %p32, %p33
      %p35 = scmp.ne.s32.totalorder %s26, %s27
      %p36 = scmp.eq.s32.totalorder %s21, 0
      %p37 = por %p35, %p36
      %p38 = scmp.ne.s32.totalorder %s26, %s27
      %p39 = scmp.eq.s32.totalorder %s22, 1
      %p40 = por %p38, %p39
      %p42 = scmp.ne.s32.totalorder %s27, %s41
      %p43 = scmp.eq.s32.totalorder %s22, 0
      %p44 = por %p42, %p43
      %s45 = ssub.s32 %s16, %s23
      %p46 = scmp.eq.s32.totalorder %s45, 0
      %s48 = sadd.s32 %s47, 1
      %s49 = scalar_select %p46, %s47, %s48
      %p52 = pneg %p46
      %p53 = scmp.eq.s32.totalorder %s16, 1
      %p54 = por %p52, %p53
      %p55 = scmp.ne.s32.totalorder %s47, %s50
      %p56 = scmp.eq.s32.totalorder %s16, 0
      %p57 = por %p55, %p56
      %p58 = scmp.ne.s32.totalorder %s47, %s50
      %p59 = scmp.eq.s32.totalorder %s21, 1
      %p60 = por %p58, %p59
      %p61 = scmp.ne.s32.totalorder %s50, %s51
      %p62 = scmp.eq.s32.totalorder %s21, 0
      %p63 = por %p61, %p62
      %p64 = scmp.ne.s32.totalorder %s50, %s51
      %p65 = scmp.eq.s32.totalorder %s22, 1
      %p66 = por %p64, %p65
      %p68 = scmp.ne.s32.totalorder %s51, %s67
      %p69 = scmp.eq.s32.totalorder %s22, 0
      %p70 = por %p68, %p69
      %s71 = ssub.s32 %s16, %s23
      %p72 = scmp.eq.s32.totalorder %s71, 0
      %s74 = sadd.s32 %s73, 1
      %s75 = scalar_select %p72, %s73, %s74
      %p78 = pneg %p72
      %p79 = scmp.eq.s32.totalorder %s16, 1
      %p80 = por %p78, %p79
      %p81 = scmp.ne.s32.totalorder %s73, %s76
      %p82 = scmp.eq.s32.totalorder %s16, 0
      %p83 = por %p81, %p82
      %p84 = scmp.ne.s32.totalorder %s73, %s76
      %p85 = scmp.eq.s32.totalorder %s21, 1
      %p86 = por %p84, %p85
      %p87 = scmp.ne.s32.totalorder %s76, %s77
      %p88 = scmp.eq.s32.totalorder %s21, 0
      %p89 = por %p87, %p88
      %p90 = scmp.ne.s32.totalorder %s76, %s77
      %p91 = scmp.eq.s32.totalorder %s22, 1
      %p92 = por %p90, %p91
      %p94 = scmp.ne.s32.totalorder %s77, %s93
      %p95 = scmp.eq.s32.totalorder %s22, 0
      %p96 = por %p94, %p95
      %s97 = ssub.s32 %s16, %s23
      %p98 = scmp.eq.s32.totalorder %s97, 0
      %s100 = sadd.s32 %s99, 1
      %s101 = scalar_select %p98, %s99, %s100
      %p104 = pneg %p98
      %p105 = scmp.eq.s32.totalorder %s16, 1
      %p106 = por %p104, %p105
      %p107 = scmp.ne.s32.totalorder %s99, %s102
      %p108 = scmp.eq.s32.totalorder %s16, 0
      %p109 = por %p107, %p108
      %p110 = scmp.ne.s32.totalorder %s99, %s102
      %p111 = scmp.eq.s32.totalorder %s21, 1
      %p112 = por %p110, %p111
      %p113 = scmp.ne.s32.totalorder %s102, %s103
      %p114 = scmp.eq.s32.totalorder %s21, 0
      %p115 = por %p113, %p114
      %p116 = scmp.ne.s32.totalorder %s102, %s103
      %p117 = scmp.eq.s32.totalorder %s22, 1
      %p118 = por %p116, %p117
      %p120 = scmp.ne.s32.totalorder %s103, %s119
      %p121 = scmp.eq.s32.totalorder %s22, 0
      %p122 = por %p120, %p121
      %p123 = scmp.le.s32.totalorder 1, %s16
      %p124 = scmp.lt.s32.totalorder %s16, 3
      %p125 = pnand %p123, %p124
      %p126 = pneg %p125
      // Predicated region
      $region9: #{tpu_custom_call.1} parent=5 // pred_check
        _
      $region10: #{tpu_custom_call.1} parent=5 // pred_check_branch
        %128 = sbr.rel (%p125) target = $region12
      $region11: #{tpu_custom_call.1} parent=5 // pred_region
        %s129 = ssub.s32 %s16, 1
        // Predicated region
        $region13: #{tpu_custom_call.1} parent=11 // pred_check
          %p130 = pneg %p37
        $region14: #{tpu_custom_call.1} parent=11 // pred_check_branch
          %132 = sbr.rel (%p130) target = $region16
        $region15: #{tpu_custom_call.1} parent=11 // pred_region
          _
        $region16: #{tpu_custom_call.1} parent=11 // pred_fallthru
          _
      $region12: #{tpu_custom_call.1} parent=5 // pred_fallthru
        _
      %p133 = scmp.lt.s32.totalorder %s16, 2
      // Predicated region
      $region17: #{tpu_custom_call.1} parent=5 // pred_check
        %p134 = pneg %p133
      $region18: #{tpu_custom_call.1} parent=5 // pred_check_branch
        %136 = sbr.rel (%p134) target = $region20
      $region19: #{tpu_custom_call.1} parent=5 // pred_region
        // Predicated region
        $region21: #{tpu_custom_call.1} parent=19 // pred_check
          %p137 = pneg %p57
        $region22: #{tpu_custom_call.1} parent=19 // pred_check_branch
          %139 = sbr.rel (%p137) target = $region24
        $region23: #{tpu_custom_call.1} parent=19 // pred_region
          %s140 = sand.u32 %s47, 1
          %s141 = scalar_lea.sflag [#allocation4], %s140
          %s142 = sand.u32 %s47, 1
          %s143 = smul.addr %s142, 8
          %s144 = scalar_lea.vmem [#allocation3], %s143
          %s146 = ssub.s32 128, 128
          %147 = vsyncadd %s141, %s146
          %s148 = smul.addr %s16, 2
          %s149 = smul.addr %s148, 64
          %s150 = scalar_lea.hbm %s1, %s149
          %s152 = sshll.u32 %s144, 4
          %s153 = int_to_ptr.vmem [resolvable:$true] %s152
          %155 = dma.hbm_to_vmem [thread:$0]  %s150, 128, %s153, %s141
        $region24: #{tpu_custom_call.1} parent=19 // pred_fallthru
          _
        // Predicated region
        $region25: #{tpu_custom_call.1} parent=19 // pred_check
          %p156 = pneg %p83
        $region26: #{tpu_custom_call.1} parent=19 // pred_check_branch
          %158 = sbr.rel (%p156) target = $region28
        $region27: #{tpu_custom_call.1} parent=19 // pred_region
          %p159 = scmp.lt.s32.totalorder %s16, 1
          %s160 = scalar_select %p159, %s16, 1
          %s161 = smul.addr %s160, 2
          %s162 = scalar_lea.vmem %s2, %s161
        $region28: #{tpu_custom_call.1} parent=19 // pred_fallthru
          _
      $region20: #{tpu_custom_call.1} parent=5 // pred_fallthru
        _
      %p163 = scmp.le.s32.totalorder 1, %s16
      %p164 = scmp.lt.s32.totalorder %s16, 3
      %p165 = pnand %p163, %p164
      %p166 = pneg %p165
      // Predicated region
      $region29: #{tpu_custom_call.1} parent=5 // pred_check
        _
      $region30: #{tpu_custom_call.1} parent=5 // pred_check_branch
        %168 = sbr.rel (%p165) target = $region32
      $region31: #{tpu_custom_call.1} parent=5 // pred_region
        %s169 = ssub.s32 %s16, 1
        %s170 = sand.u32 %s50, 1
        %s171 = scalar_lea.sflag [#allocation4], %s170
        %s172 = sand.u32 %s50, 1
        %s173 = smul.addr %s172, 8
        %s174 = scalar_lea.vmem [#allocation3], %s173
        // Predicated region
        $region33: #{tpu_custom_call.1} parent=31 // pred_check
          %p175 = pneg %p63
        $region34: #{tpu_custom_call.1} parent=31 // pred_check_branch
          %177 = sbr.rel (%p175) target = $region36
        $region35: #{tpu_custom_call.1} parent=31 // pred_region
          %178 = dma.done %s171, 128
        $region36: #{tpu_custom_call.1} parent=31 // pred_fallthru
          _
        %p179 = pneg %p37
        %p180 = pneg %p34
        %s181 = sand.u32 %s50, 1
        %s182 = scalar_lea.sflag [#allocation4], %s181
        %s183 = sand.u32 %s50, 1
        %s184 = smul.addr %s183, 8
        %s185 = scalar_lea.vmem [#allocation3], %s184
        %p186 = pneg %p63
        %p187 = pneg %p60
        %p188 = scmp.lt.s32.totalorder %s21, 1
        %s189 = scalar_select %p188, %s21, 1
        %s190 = smul.addr %s189, 2
        %s191 = scalar_lea.vmem %s2, %s190
        %p192 = pneg %p89
        %p193 = pneg %p86
        %p194 = pneg %p115
        %p195 = pneg %p112
        %s196 = sand.u32 %s102, 1
        %s197 = scalar_lea.sflag [#allocation5], %s196
        %s198 = sand.u32 %s102, 1
        %s199 = smul.addr %s198, 8
        %s200 = scalar_lea.vmem [#allocation6], %s199
        %p201 = scmp.lt.s32.totalorder %s21, 1
        %s202 = scalar_select %p201, %s21, 1
        %s203 = smul.addr %s202, 2
        %s204 = scalar_lea.vmem %s2, %s203
        %v205 = vld [vmem:[%s174] sm:$0xff]
        %v206 = vld [vmem:[%s204] sm:$0x3]
        %v208 = vlaneseq
        %v209 = vshrl.u32 %v208, 7
        %v210 = vsub.s32 0, %v209
        %v211 = vrot.slane %v206, %v210
        %v212 = vlaneseq
        %v213 = vshrl.u32 %v212, 7
        %v214 = vsub.s32 1, %v213
        %v215 = vrot.slane %v206, %v214
        %v216 = vcombine.low %v211, %v215
        %v218 = vmul.f32 %v205, %v216
        %v220 = vcombine.high %v218, %v218
        %222 = vmatprep.subr.mxu0 %v220
        %223 = vmatpush1.xpose.msra.mxu0 %v218
        %224 = vmatprep.subr.mxu0 0.0
        %225 = vmatpush1.xpose.msra.mxu0 0.0
        %226 = vmatprep.subr.mxu0 0.0
        %227 = vmatpush1.xpose.msra.mxu0 0.0
        %228 = vmatprep.subr.mxu0 0.0
        %229 = vmatpush1.xpose.msra.mxu0 0.0
        %230 = vmatprep.subr.mxu0 0.0
        %231 = vmatpush1.xpose.msra.mxu0 0.0
        %232 = vmatprep.subr.mxu0 0.0
        %233 = vmatpush1.xpose.msra.mxu0 0.0
        %234 = vmatprep.subr.mxu0 0.0
        %235 = vmatpush1.xpose.msra.mxu0 0.0
        %236 = vmatprep.subr.mxu0 0.0
        %237 = vmatpush1.xpose.msra.mxu0 0.0
        %238 = vmatprep.subr.mxu0 0.0
        %239 = vmatpush1.xpose.msra.mxu0 0.0
        %240 = vmatprep.subr.mxu0 0.0
        %241 = vmatpush1.xpose.msra.mxu0 0.0
        %242 = vmatprep.subr.mxu0 0.0
        %243 = vmatpush1.xpose.msra.mxu0 0.0
        %244 = vmatprep.subr.mxu0 0.0
        %245 = vmatpush1.xpose.msra.mxu0 0.0
        %246 = vmatprep.subr.mxu0 0.0
        %247 = vmatpush1.xpose.msra.mxu0 0.0
        %248 = vmatprep.subr.mxu0 0.0
        %249 = vmatpush1.xpose.msra.mxu0 0.0
        %250 = vmatprep.subr.mxu0 0.0
        %251 = vmatpush1.xpose.msra.mxu0 0.0
        %252 = vmatprep.subr.mxu0 0.0
        %253 = vmatpush1.xpose.msra.mxu0 0.0
        %254 = vmatprep.subr.mxu0 0.0
        %255 = vmatpush1.xpose.msra.mxu0 0.0
        %256 = vmatprep.subr.mxu0 0.0
        %257 = vmatpush1.xpose.msra.mxu0 0.0
        %258 = vmatprep.subr.mxu0 0.0
        %259 = vmatpush1.xpose.msra.mxu0 0.0
        %260 = vmatprep.subr.mxu0 0.0
        %261 = vmatpush1.xpose.msra.mxu0 0.0
        %262 = vmatprep.subr.mxu0 0.0
        %263 = vmatpush1.xpose.msra.mxu0 0.0
        %264 = vmatprep.subr.mxu0 0.0
        %265 = vmatpush1.xpose.msra.mxu0 0.0
        %266 = vmatprep.subr.mxu0 0.0
        %267 = vmatpush1.xpose.msra.mxu0 0.0
        %268 = vmatprep.subr.mxu0 0.0
        %269 = vmatpush1.xpose.msra.mxu0 0.0
        %270 = vmatprep.subr.mxu0 0.0
        %271 = vmatpush1.xpose.msra.mxu0 0.0
        %272 = vmatprep.subr.mxu0 0.0
        %273 = vmatpush1.xpose.msra.mxu0 0.0
        %274 = vmatprep.subr.mxu0 0.0
        %275 = vmatpush1.xpose.msra.mxu0 0.0
        %276 = vmatprep.subr.mxu0 0.0
        %277 = vmatpush1.xpose.msra.mxu0 0.0
        %278 = vmatprep.subr.mxu0 0.0
        %279 = vmatpush1.xpose.msra.mxu0 0.0
        %280 = vmatprep.subr.mxu0 0.0
        %281 = vmatpush1.xpose.msra.mxu0 0.0
        %282 = vmatprep.subr.mxu0 0.0
        %283 = vmatpush1.xpose.msra.mxu0 0.0
        %284 = vmatprep.subr.mxu0 0.0
        %285 = vmatpush1.xpose.msra.mxu0 0.0
        %286 = vmatprep.mubr.f32.mxu0 %v220
        %287 = vmatmul.mubr.f32.gmra.mrb[0].mxu0 %v218
        %v288 = vpop.f32.mrb[0].mxu0
        %v289 = vadd.f32 0.0, %v288
        %v290 = vpop.f32.mrb[0].mxu0
        %291 = vdwg.mxu0
        %vm292 = vcmask 27648
        %v293 = vsel %vm292, %v289, -inf
        %294 = vmax.xlane.f32.xlu0 %v293
        %v295 = vpop.xlane.xlu0 %294
        %v296 = vsub.f32 %v289, %v295
        %v297 = vmul.f32 %v296, 1.442695
        %v298 = vpow.pop %v297
        %v299 = vsel %vm292, %v298, 0.0
        %300 = vadd.xlane.f32.xlu0 %v299
        %v301 = vpop.xlane.xlu0 %300
        %v302 = vrcp.pop %v301
        %v303 = vmul.f32 %v298, %v302
        %v305 = vcombine.high %v205, %v205
        %vm306 = vcmask 31744
        %v308 = vsel %vm306, %v303, 0
        %vm310 = vcmask 1043456
        %v311 = vsel %vm310, %v205, 0
        %v313 = vsel %vm310, %v305, 0
        %315 = vmatprep.subr.mxu0 %v313
        %316 = vmatpush1.msra.mxu0 %v311
        %317 = vmatprep.subr.mxu0 0.0
        %318 = vmatpush1.msra.mxu0 0.0
        %319 = vmatprep.subr.mxu0 0.0
        %320 = vmatpush1.msra.mxu0 0.0
        %321 = vmatprep.subr.mxu0 0.0
        %322 = vmatpush1.msra.mxu0 0.0
        %323 = vmatprep.subr.mxu0 0.0
        %324 = vmatpush1.msra.mxu0 0.0
        %325 = vmatprep.subr.mxu0 0.0
        %326 = vmatpush1.msra.mxu0 0.0
        %327 = vmatprep.subr.mxu0 0.0
        %328 = vmatpush1.msra.mxu0 0.0
        %329 = vmatprep.subr.mxu0 0.0
        %330 = vmatpush1.msra.mxu0 0.0
        %331 = vmatprep.subr.mxu0 0.0
        %332 = vmatpush1.msra.mxu0 0.0
        %333 = vmatprep.subr.mxu0 0.0
        %334 = vmatpush1.msra.mxu0 0.0
        %335 = vmatprep.subr.mxu0 0.0
        %336 = vmatpush1.msra.mxu0 0.0
        %337 = vmatprep.subr.mxu0 0.0
        %338 = vmatpush1.msra.mxu0 0.0
        %339 = vmatprep.subr.mxu0 0.0
        %340 = vmatpush1.msra.mxu0 0.0
        %341 = vmatprep.subr.mxu0 0.0
        %342 = vmatpush1.msra.mxu0 0.0
        %343 = vmatprep.subr.mxu0 0.0
        %344 = vmatpush1.msra.mxu0 0.0
        %345 = vmatprep.subr.mxu0 0.0
        %346 = vmatpush1.msra.mxu0 0.0
        %347 = vmatprep.subr.mxu0 0.0
        %348 = vmatpush1.msra.mxu0 0.0
        %349 = vmatprep.subr.mxu0 0.0
        %350 = vmatpush1.msra.mxu0 0.0
        %351 = vmatprep.subr.mxu0 0.0
        %352 = vmatpush1.msra.mxu0 0.0
        %353 = vmatprep.subr.mxu0 0.0
        %354 = vmatpush1.msra.mxu0 0.0
        %355 = vmatprep.subr.mxu0 0.0
        %356 = vmatpush1.msra.mxu0 0.0
        %357 = vmatprep.subr.mxu0 0.0
        %358 = vmatpush1.msra.mxu0 0.0
        %359 = vmatprep.subr.mxu0 0.0
        %360 = vmatpush1.msra.mxu0 0.0
        %361 = vmatprep.subr.mxu0 0.0
        %362 = vmatpush1.msra.mxu0 0.0
        %363 = vmatprep.subr.mxu0 0.0
        %364 = vmatpush1.msra.mxu0 0.0
        %365 = vmatprep.subr.mxu0 0.0
        %366 = vmatpush1.msra.mxu0 0.0
        %367 = vmatprep.subr.mxu0 0.0
        %368 = vmatpush1.msra.mxu0 0.0
        %369 = vmatprep.subr.mxu0 0.0
        %370 = vmatpush1.msra.mxu0 0.0
        %371 = vmatprep.subr.mxu0 0.0
        %372 = vmatpush1.msra.mxu0 0.0
        %373 = vmatprep.subr.mxu0 0.0
        %374 = vmatpush1.msra.mxu0 0.0
        %375 = vmatprep.subr.mxu0 0.0
        %376 = vmatpush1.msra.mxu0 0.0
        %377 = vmatprep.subr.mxu0 0.0
        %378 = vmatpush1.msra.mxu0 0.0
        %379 = vmatprep.mubr.f32.mxu0 0.0
        %380 = vmatmul.mubr.f32.gmra.mrb[0].mxu0 %v308
        %v381 = vpop.f32.mrb[0].mxu0
        %v382 = vadd.f32 0.0, %v381
        %v383 = vpop.f32.mrb[0].mxu0
        %v384 = vadd.f32 0.0, %v383
        %385 = vdwg.mxu0
        %s386 = sld [smem:[#allocation2]]
        %v387 = vstv %s386
        %v388 = vmul.f32 %v387, %v382
        %v389 = vmul.f32 %v387, %v384
        %v391 = vadd.f32 %v388, %v205
        %v392 = vadd.f32 %v389, %v305
        %v395 = vcombine.low %v391, %v392
        %397 = vst [vmem:[%s200] sm:$0xff] %v395
        %s398 = sand.u32 %s102, 1
        %s399 = scalar_lea.sflag [#allocation5], %s398
        %s400 = sand.u32 %s102, 1
        %s401 = smul.addr %s400, 8
        %s402 = scalar_lea.vmem [#allocation6], %s401
        // Predicated region
        $region37: #{tpu_custom_call.1} parent=31 // pred_check
          %p403 = pneg %p112
        $region38: #{tpu_custom_call.1} parent=31 // pred_check_branch
          %405 = sbr.rel (%p403) target = $region40
        $region39: #{tpu_custom_call.1} parent=31 // pred_region
          %s407 = ssub.s32 128, 128
          %408 = vsyncadd %s399, %s407
          %s409 = smul.addr %s21, 2
          %s410 = smul.addr %s409, 64
          %s411 = scalar_lea.hbm %s3, %s410
          %s413 = sshll.u32 %s402, 4
          %s414 = int_to_ptr.vmem [resolvable:$true] %s413
          %416 = dma.vmem_to_hbm [thread:$0]  %s414, 128, %s411, %s399
        $region40: #{tpu_custom_call.1} parent=31 // pred_fallthru
          _
      $region32: #{tpu_custom_call.1} parent=5 // pred_fallthru
        _
      %p417 = scmp.le.s32.totalorder 2, %s16
      // Predicated region
      $region41: #{tpu_custom_call.1} parent=5 // pred_check
        %p418 = pneg %p417
      $region42: #{tpu_custom_call.1} parent=5 // pred_check_branch
        %420 = sbr.rel (%p418) target = $region44
      $region43: #{tpu_custom_call.1} parent=5 // pred_region
        %s421 = ssub.s32 %s16, 2
        // Predicated region
        $region45: #{tpu_custom_call.1} parent=43 // pred_check
          %p422 = pneg %p118
        $region46: #{tpu_custom_call.1} parent=43 // pred_check_branch
          %424 = sbr.rel (%p422) target = $region48
        $region47: #{tpu_custom_call.1} parent=43 // pred_region
          %s425 = sand.u32 %s103, 1
          %s426 = scalar_lea.sflag [#allocation5], %s425
          %s427 = sand.u32 %s103, 1
          %s428 = smul.addr %s427, 8
          %s429 = scalar_lea.vmem [#allocation6], %s428
          %430 = dma.done %s426, 128
        $region48: #{tpu_custom_call.1} parent=43 // pred_fallthru
          _
      $region44: #{tpu_custom_call.1} parent=5 // pred_fallthru
        _
    $region6: #{tpu_custom_call.1} parent=1 // loop_footer
      %s20 = sadd.s32 1, %s16
    $region7: #{tpu_custom_call.1} parent=1 // loop_footer_branch
      %15 = sbr.rel target = $region3
    $region8: #{tpu_custom_call.1} parent=1 // loop_exit
      _
    %431 = vsyncpa [#allocation4], 1
    %s432 = scalar_lea.sflag [#allocation4], 1
    %433 = vsyncpa %s432, 1
    %434 = vsyncpa [#allocation5], 1
    %s435 = scalar_lea.sflag [#allocation5], 1
    %436 = vsyncpa %s435, 1

</llo_original>
